<compile_context>
chip_gen: v5e
topology: v5e:2x2
jax: 0.10.0
libtpu: 0.0.40
codegen_flags: <defaults>
</compile_context>

<pallas_src>
import functools
import math

import jax
import jax.numpy as jnp
from jax.experimental import pallas as pl
from jax.experimental.pallas import tpu as pltpu

_EPS = 1e-6
_BCE_CLAMP = 1e-12
_NUM_CORE_SLICES = 2            # v7x megacore split; harmless on 1-TC chips
_TARGET_BLOCK_BYTES = 4 << 20   # combined (p + y) bytes DMA'd per grid step
_SUB_ROWS = 256                 # in-kernel compute chunk (keeps temporaries small)


def _recall_loss_kernel(p_ref, y_ref, tp_ref, pos_ref, bce_ref, *,
                        bce: bool, tile_m: int, sub_m: int, m_rows: int,
                        steps_per_core: int, mask_from: int, may_mask: bool):
    c = pl.program_id(0)                 # core slice (parallel axis)
    i = pl.program_id(1)                 # reduction step within the slice
    b = c * steps_per_core + i           # global (unclamped) block index

    # --- per-core-slice accumulator init ---
    @pl.when(i == 0)
    def _init():
        tp_ref[...] = jnp.zeros_like(tp_ref)
        pos_ref[...] = jnp.zeros_like(pos_ref)
        bce_ref[...] = jnp.zeros_like(bce_ref)

    base_row = b * tile_m                # first folded row of this block

    def accum_chunk(pf, yf, row0, masked):
        # pf, yf: (rows, W) f32 chunk; row0: global row index of first row.
        if masked:
            row = row0 + jax.lax.broadcasted_iota(jnp.int32, pf.shape, 0)
            valid = row < m_rows
            # select (NaN-safe): garbage in the out-of-bounds tail cannot
            # poison the accumulators.
            yf = jnp.where(valid, yf, 0.0)
        pd = (pf >= 0.5).astype(jnp.float32)
        tp_ref[...] += jnp.sum(yf * pd, axis=0, keepdims=True)[None]
        pos_ref[...] += jnp.sum(yf, axis=0, keepdims=True)[None]
        if bce:
            pc = jnp.clip(pf, _BCE_CLAMP, 1.0 - _BCE_CLAMP)
            # single-log BCE: == y*log(pc) + (1-y)*log(1-pc) for binary y,
            # but only one transcendental per element (EUP relief).
            ll = -jnp.log(jnp.where(yf >= 0.5, pc, 1.0 - pc))
            if masked:
                ll = jnp.where(valid, ll, 0.0)   # select, NaN-safe
            bce_ref[...] += jnp.sum(ll, axis=0, keepdims=True)[None]

    n_full = tile_m // sub_m
    rem = tile_m % sub_m

    def process(masked):
        # Chunk the (tile_m, W) DMA block so live f32 temporaries stay small.
        if n_full:
            @pl.loop(0, n_full)
            def _(j):
                r0 = pl.multiple_of(j * sub_m, sub_m)
                accum_chunk(p_ref[pl.ds(r0, sub_m), :].astype(jnp.float32),
                            y_ref[pl.ds(r0, sub_m), :].astype(jnp.float32),
                            base_row + r0, masked)
        if rem:
            r0 = n_full * sub_m
            accum_chunk(p_ref[pl.ds(r0, rem), :].astype(jnp.float32),
                        y_ref[pl.ds(r0, rem), :].astype(jnp.float32),
                        base_row + r0, masked)

    if may_mask:
        # Only the ragged last block / beyond-end duplicate pays mask work.
        @pl.when(b >= mask_from)
        def _tail():
            process(True)

        @pl.when(b < mask_from)
        def _body():
            process(False)
    else:
        process(False)


def _round_down(x: int, m: int) -> int:
    return (x // m) * m


def recall_loss(p, y, *, bce: bool = False, factor: float = 1.0):
    """Pallas implementation of RecallLoss.forward(p, y). p, y: (N, C)."""
    assert p.ndim == 2 and p.shape == y.shape
    N, C = p.shape

    # --- lane-fold small C into the 128-lane axis (free row-major reshape) ---
    g = 1
    if C < 128 and 128 % C == 0:
        g = math.gcd(N, 128 // C)
    M, W = N // g, g * C
    p2 = p.reshape(M, W)
    y2 = y.reshape(M, W)
    # NOTE: for extremely large C the (tm, C) block itself would need lane
    # tiling; typical label counts (tens..thousands) are fine.

    # --- block rows: ~_TARGET_BLOCK_BYTES of combined input per grid step ---
    row_bytes = W * (p.dtype.itemsize + y.dtype.itemsize)
    tm = _TARGET_BLOCK_BYTES // max(row_bytes, 1)
    # Multiple of _SUB_ROWS (also covers bf16/int8 sublane packing), or full M.
    tm = min(M, max(_SUB_ROWS, _round_down(tm, _SUB_ROWS)))

    n_blk = pl.cdiv(M, tm)
    spc = pl.cdiv(n_blk, _NUM_CORE_SLICES)          # steps per core slice
    ragged = (M % tm) != 0
    may_mask = ragged or (spc * _NUM_CORE_SLICES != n_blk)
    mask_from = (n_blk - 1) if ragged else n_blk

    kernel = functools.partial(
        _recall_loss_kernel, bce=bce, tile_m=tm, sub_m=_SUB_ROWS, m_rows=M,
        steps_per_core=spc, mask_from=mask_from, may_mask=may_mask)

    def in_map(c, i):
        # Clamp beyond-end duplicate blocks to the last real block; their
        # contribution is fully masked away in-kernel.
        return (jnp.minimum(c * spc + i, n_blk - 1), 0)

    out_spec = pl.BlockSpec((1, 1, W), lambda c, i: (c, 0, 0))
    out_shape = [jax.ShapeDtypeStruct((_NUM_CORE_SLICES, 1, W), jnp.float32)] * 3

    tp_out, pos_out, bce_out = pl.pallas_call(
        kernel,
        out_shape=out_shape,
        grid_spec=pltpu.PrefetchScalarGridSpec(
            num_scalar_prefetch=0,
            grid=(_NUM_CORE_SLICES, spc),
            in_specs=[
                pl.BlockSpec((tm, W), in_map),
                pl.BlockSpec((tm, W), in_map),
            ],
            out_specs=[out_spec, out_spec, out_spec],
        ),
        compiler_params=pltpu.CompilerParams(
            dimension_semantics=("parallel", "arbitrary"),
            vmem_limit_bytes=32 * 1024 * 1024),
    )(p2, y2)

    # --- tiny epilogue on (W,)-sized partials: fold groups, combine ---
    tp = jnp.sum(tp_out, axis=(0, 1))
    pos = jnp.sum(pos_out, axis=(0, 1))
    if g > 1:
        tp = tp.reshape(g, C).sum(axis=0)
        pos = pos.reshape(g, C).sum(axis=0)
    recall = tp / (pos + _EPS)
    rloss = 1.0 - jnp.mean(recall)
    if bce:
        oloss = jnp.sum(bce_out) / float(N * C)
        rloss = oloss + rloss * factor
    return rloss


def _recall_loss_ref(p, y, *, bce: bool = False, factor: float = 1.0):
    """Pure-JAX reference for correctness checking."""
    p = p.astype(jnp.float32)
    y = y.astype(jnp.float32)
    pd = (p >= 0.5).astype(jnp.float32)
    tp = jnp.sum(y * pd, axis=0)
    pos = jnp.sum(y, axis=0)
    rloss = 1.0 - jnp.mean(tp / (pos + _EPS))
    if bce:
        pc = jnp.clip(p, _BCE_CLAMP, 1.0 - _BCE_CLAMP)
        oloss = jnp.mean(-(y * jnp.log(pc) + (1.0 - y) * jnp.log(1.0 - pc)))
        rloss = oloss + rloss * factor
    return rloss


if __name__ == "__main__":
    key = jax.random.PRNGKey(0)
    k_p, k_y = jax.random.split(key)

    # Small shapes consistent with the module: (batch, num_labels).
    N, C = 8, 16
    p = jax.nn.sigmoid(jax.random.normal(k_p, (N, C), dtype=jnp.float32))
    y = (jax.random.uniform(k_y, (N, C)) < 0.5).astype(jnp.float32)

    # bce=False (module default)
    out0 = jax.block_until_ready(recall_loss(p, y, bce=False, factor=1.0))
    ref0 = _recall_loss_ref(p, y, bce=False, factor=1.0)
    assert jnp.allclose(out0, ref0, rtol=1e-5, atol=1e-5), (out0, ref0)

    # bce=True path
    out1 = jax.block_until_ready(recall_loss(p, y, bce=True, factor=0.5))
    ref1 = _recall_loss_ref(p, y, bce=True, factor=0.5)
    assert jnp.allclose(out1, ref1, rtol=1e-5, atol=1e-5), (out1, ref1)

    # Un-foldable batch (odd N -> g=1), single full-extent block + remainder chunk.
    N2 = 1001
    p2 = jax.nn.sigmoid(jax.random.normal(k_p, (N2, C), dtype=jnp.float32))
    y2 = (jax.random.uniform(k_y, (N2, C)) < 0.5).astype(jnp.float32)
    out2 = jax.block_until_ready(recall_loss(p2, y2, bce=True, factor=0.5))
    ref2 = _recall_loss_ref(p2, y2, bce=True, factor=0.5)
    assert jnp.allclose(out2, ref2, rtol=1e-4, atol=1e-5), (out2, ref2)

    # bf16 streaming + multi-block grid + ragged masked tail + core split.
    N3, C3 = 5000, 256
    p3 = jax.nn.sigmoid(
        jax.random.normal(k_p, (N3, C3), dtype=jnp.float32)).astype(jnp.bfloat16)
    y3 = (jax.random.uniform(k_y, (N3, C3)) < 0.5).astype(jnp.bfloat16)
    out3 = jax.block_until_ready(recall_loss(p3, y3, bce=True, factor=0.5))
    ref3 = _recall_loss_ref(p3, y3, bce=True, factor=0.5)
    assert jnp.allclose(out3, ref3, rtol=2e-3, atol=1e-4), (out3, ref3)

    print("KERNEL_OK")
</pallas_src>

<mosaic_0001>
module attributes {stable_mosaic.version = 11 : i64} {
  func.func @_recall_loss_kernel(%arg0: i32, %arg1: i32, %arg2: memref<1x128xf32, #tpu.memory_space<vmem>>, %arg3: memref<1x128xf32, #tpu.memory_space<vmem>>, %arg4: memref<1x1x128xf32, #tpu.memory_space<vmem>>, %arg5: memref<1x1x128xf32, #tpu.memory_space<vmem>>, %arg6: memref<1x1x128xf32, #tpu.memory_space<vmem>>) attributes {dimension_semantics = [#tpu.dimension_semantics<parallel>, #tpu.dimension_semantics<arbitrary>], iteration_bounds = array<i64: 2, 1>, scalar_prefetch = 0 : i64, scratch_operands = 0 : i64, tpu.core_type = #tpu.core_type<tc>, window_params = [{transform_indices = @transform_0, window_bounds = array<i64: 1, 128>}, {transform_indices = @transform_1, window_bounds = array<i64: 1, 128>}, {transform_indices = @transform_2, window_bounds = array<i64: 1, 1, 128>}, {transform_indices = @transform_3, window_bounds = array<i64: 1, 1, 128>}, {transform_indices = @transform_4, window_bounds = array<i64: 1, 1, 128>}]} {
    %c1_i32 = arith.constant 1 : i32
    %0 = arith.muli %arg0, %c1_i32 : i32
    %1 = arith.addi %0, %arg1 : i32
    %c0_i32 = arith.constant 0 : i32
    %2 = arith.cmpi eq, %arg1, %c0_i32 : i32
    %3 = arith.extui %2 : i1 to i32
    %c0_i32_0 = arith.constant 0 : i32
    %4 = arith.cmpi ne, %3, %c0_i32_0 : i32
    scf.if %4 {
      %cst = arith.constant 0.000000e+00 : f32
      %12 = vector.broadcast %cst : f32 to vector<1x1x128xf32>
      %c0 = arith.constant 0 : index
      %c0_6 = arith.constant 0 : index
      %c0_7 = arith.constant 0 : index
      %13 = vector.load %arg4[%c0, %c0_6, %c0_7] : memref<1x1x128xf32, #tpu.memory_space<vmem>>, vector<1x1x128xf32>
      tpu.vector_store %arg4[%c0, %c0_6, %c0_7], %12 {strides = array<i32>} : memref<1x1x128xf32, #tpu.memory_space<vmem>>, vector<1x1x128xf32>,
      %cst_8 = arith.constant 0.000000e+00 : f32
      %14 = vector.broadcast %cst_8 : f32 to vector<1x1x128xf32>
      %c0_9 = arith.constant 0 : index
      %c0_10 = arith.constant 0 : index
      %c0_11 = arith.constant 0 : index
      %15 = vector.load %arg5[%c0_9, %c0_10, %c0_11] : memref<1x1x128xf32, #tpu.memory_space<vmem>>, vector<1x1x128xf32>
      tpu.vector_store %arg5[%c0_9, %c0_10, %c0_11], %14 {strides = array<i32>} : memref<1x1x128xf32, #tpu.memory_space<vmem>>, vector<1x1x128xf32>,
      %cst_12 = arith.constant 0.000000e+00 : f32
      %16 = vector.broadcast %cst_12 : f32 to vector<1x1x128xf32>
      %c0_13 = arith.constant 0 : index
      %c0_14 = arith.constant 0 : index
      %c0_15 = arith.constant 0 : index
      %17 = vector.load %arg6[%c0_13, %c0_14, %c0_15] : memref<1x1x128xf32, #tpu.memory_space<vmem>>, vector<1x1x128xf32>
      tpu.vector_store %arg6[%c0_13, %c0_14, %c0_15], %16 {strides = array<i32>} : memref<1x1x128xf32, #tpu.memory_space<vmem>>, vector<1x1x128xf32>,
    } else {
    }
    %c1_i32_1 = arith.constant 1 : i32
    %5 = arith.muli %1, %c1_i32_1 : i32
    %c1_i32_2 = arith.constant 1 : i32
    %6 = arith.cmpi sge, %1, %c1_i32_2 : i32
    %7 = arith.extui %6 : i1 to i32
    %c0_i32_3 = arith.constant 0 : i32
    %8 = arith.cmpi ne, %7, %c0_i32_3 : i32
    scf.if %8 {
      %c0 = arith.constant 0 : index
      %c0_6 = arith.constant 0 : index
      %12 = vector.load %arg2[%c0, %c0_6] : memref<1x128xf32, #tpu.memory_space<vmem>>, vector<1x128xf32>
      %c0_7 = arith.constant 0 : index
      %c0_8 = arith.constant 0 : index
      %13 = vector.load %arg3[%c0_7, %c0_8] : memref<1x128xf32, #tpu.memory_space<vmem>>, vector<1x128xf32>
      %c0_i32_9 = arith.constant 0 : i32
      %14 = arith.addi %5, %c0_i32_9 : i32
      %15 = tpu.iota {dimensions = array<i32: 0>} : vector<1x128xi32>
      %16 = vector.broadcast %14 : i32 to vector<1x128xi32>
      %17 = arith.addi %16, %15 : vector<1x128xi32>
      %c1_i32_10 = arith.constant 1 : i32
      %18 = vector.broadcast %c1_i32_10 : i32 to vector<1x128xi32>
      %19 = arith.cmpi slt, %17, %18 : vector<1x128xi32>
      %cst = arith.constant 0.000000e+00 : f32
      %20 = vector.broadcast %cst : f32 to vector<1x128xf32>
      %21 = arith.select %19, %13, %20 : vector<1x128xi1>, vector<1x128xf32>
      %cst_11 = arith.constant 5.000000e-01 : f32
      %22 = vector.broadcast %cst_11 : f32 to vector<1x128xf32>
      %23 = arith.cmpf oge, %12, %22 : vector<1x128xf32>
      %24 = arith.extui %23 : vector<1x128xi1> to vector<1x128xi32>
      %25 = arith.sitofp %24 : vector<1x128xi32> to vector<1x128xf32>
      %c0_12 = arith.constant 0 : index
      %c0_13 = arith.constant 0 : index
      %c0_14 = arith.constant 0 : index
      %26 = vector.load %arg4[%c0_12, %c0_13, %c0_14] : memref<1x1x128xf32, #tpu.memory_space<vmem>>, vector<1x1x128xf32>
      %27 = arith.mulf %21, %25 : vector<1x128xf32>
      %cst_15 = arith.constant dense<0.000000e+00> : vector<128xf32>
      %28 = vector.multi_reduction <add>, %27, %cst_15 [0] : vector<1x128xf32> to vector<128xf32>
      %29 = vector.shape_cast %28 : vector<128xf32> to vector<1x128xf32>
      %30 = vector.shape_cast %29 : vector<1x128xf32> to vector<1x1x128xf32>
      %31 = arith.addf %26, %30 : vector<1x1x128xf32>
      %c0_16 = arith.constant 0 : index
      %c0_17 = arith.constant 0 : index
      %c0_18 = arith.constant 0 : index
      %32 = vector.load %arg4[%c0_16, %c0_17, %c0_18] : memref<1x1x128xf32, #tpu.memory_space<vmem>>, vector<1x1x128xf32>
      tpu.vector_store %arg4[%c0_16, %c0_17, %c0_18], %31 {strides = array<i32>} : memref<1x1x128xf32, #tpu.memory_space<vmem>>, vector<1x1x128xf32>,
      %c0_19 = arith.constant 0 : index
      %c0_20 = arith.constant 0 : index
      %c0_21 = arith.constant 0 : index
      %33 = vector.load %arg5[%c0_19, %c0_20, %c0_21] : memref<1x1x128xf32, #tpu.memory_space<vmem>>, vector<1x1x128xf32>
      %cst_22 = arith.constant dense<0.000000e+00> : vector<128xf32>
      %34 = vector.multi_reduction <add>, %21, %cst_22 [0] : vector<1x128xf32> to vector<128xf32>
      %35 = vector.shape_cast %34 : vector<128xf32> to vector<1x128xf32>
      %36 = vector.shape_cast %35 : vector<1x128xf32> to vector<1x1x128xf32>
      %37 = arith.addf %33, %36 : vector<1x1x128xf32>
      %c0_23 = arith.constant 0 : index
      %c0_24 = arith.constant 0 : index
      %c0_25 = arith.constant 0 : index
      %38 = vector.load %arg5[%c0_23, %c0_24, %c0_25] : memref<1x1x128xf32, #tpu.memory_space<vmem>>, vector<1x1x128xf32>
      tpu.vector_store %arg5[%c0_23, %c0_24, %c0_25], %37 {strides = array<i32>} : memref<1x1x128xf32, #tpu.memory_space<vmem>>, vector<1x1x128xf32>,
    } else {
    }
    %c1_i32_4 = arith.constant 1 : i32
    %9 = arith.cmpi slt, %1, %c1_i32_4 : i32
    %10 = arith.extui %9 : i1 to i32
    %c0_i32_5 = arith.constant 0 : i32
    %11 = arith.cmpi ne, %10, %c0_i32_5 : i32
    scf.if %11 {
      %c0 = arith.constant 0 : index
      %c0_6 = arith.constant 0 : index
      %12 = vector.load %arg2[%c0, %c0_6] : memref<1x128xf32, #tpu.memory_space<vmem>>, vector<1x128xf32>
      %c0_7 = arith.constant 0 : index
      %c0_8 = arith.constant 0 : index
      %13 = vector.load %arg3[%c0_7, %c0_8] : memref<1x128xf32, #tpu.memory_space<vmem>>, vector<1x128xf32>
      %cst = arith.constant 5.000000e-01 : f32
      %14 = vector.broadcast %cst : f32 to vector<1x128xf32>
      %15 = arith.cmpf oge, %12, %14 : vector<1x128xf32>
      %16 = arith.extui %15 : vector<1x128xi1> to vector<1x128xi32>
      %17 = arith.sitofp %16 : vector<1x128xi32> to vector<1x128xf32>
      %c0_9 = arith.constant 0 : index
      %c0_10 = arith.constant 0 : index
      %c0_11 = arith.constant 0 : index
      %18 = vector.load %arg4[%c0_9, %c0_10, %c0_11] : memref<1x1x128xf32, #tpu.memory_space<vmem>>, vector<1x1x128xf32>
      %19 = arith.mulf %13, %17 : vector<1x128xf32>
      %cst_12 = arith.constant dense<0.000000e+00> : vector<128xf32>
      %20 = vector.multi_reduction <add>, %19, %cst_12 [0] : vector<1x128xf32> to vector<128xf32>
      %21 = vector.shape_cast %20 : vector<128xf32> to vector<1x128xf32>
      %22 = vector.shape_cast %21 : vector<1x128xf32> to vector<1x1x128xf32>
      %23 = arith.addf %18, %22 : vector<1x1x128xf32>
      %c0_13 = arith.constant 0 : index
      %c0_14 = arith.constant 0 : index
      %c0_15 = arith.constant 0 : index
      %24 = vector.load %arg4[%c0_13, %c0_14, %c0_15] : memref<1x1x128xf32, #tpu.memory_space<vmem>>, vector<1x1x128xf32>
      tpu.vector_store %arg4[%c0_13, %c0_14, %c0_15], %23 {strides = array<i32>} : memref<1x1x128xf32, #tpu.memory_space<vmem>>, vector<1x1x128xf32>,
      %c0_16 = arith.constant 0 : index
      %c0_17 = arith.constant 0 : index
      %c0_18 = arith.constant 0 : index
      %25 = vector.load %arg5[%c0_16, %c0_17, %c0_18] : memref<1x1x128xf32, #tpu.memory_space<vmem>>, vector<1x1x128xf32>
      %cst_19 = arith.constant dense<0.000000e+00> : vector<128xf32>
      %26 = vector.multi_reduction <add>, %13, %cst_19 [0] : vector<1x128xf32> to vector<128xf32>
      %27 = vector.shape_cast %26 : vector<128xf32> to vector<1x128xf32>
      %28 = vector.shape_cast %27 : vector<1x128xf32> to vector<1x1x128xf32>
      %29 = arith.addf %25, %28 : vector<1x1x128xf32>
      %c0_20 = arith.constant 0 : index
      %c0_21 = arith.constant 0 : index
      %c0_22 = arith.constant 0 : index
      %30 = vector.load %arg5[%c0_20, %c0_21, %c0_22] : memref<1x1x128xf32, #tpu.memory_space<vmem>>, vector<1x1x128xf32>
      tpu.vector_store %arg5[%c0_20, %c0_21, %c0_22], %29 {strides = array<i32>} : memref<1x1x128xf32, #tpu.memory_space<vmem>>, vector<1x1x128xf32>,
    } else {
    }
    return
  }
  func.func @transform_0(%arg0: i32, %arg1: i32) -> (i32, i32) {
    %c1_i32 = arith.constant 1 : i32
    %0 = arith.muli %arg0, %c1_i32 : i32
    %1 = arith.addi %0, %arg1 : i32
    %c0_i32 = arith.constant 0 : i32
    %2 = arith.minsi %1, %c0_i32 : i32
    %c0_i32_0 = arith.constant 0 : i32
    %c0_i32_1 = arith.constant 0 : i32
    return %2, %c0_i32_0 : i32, i32
  }
  func.func @transform_1(%arg0: i32, %arg1: i32) -> (i32, i32) {
    %c1_i32 = arith.constant 1 : i32
    %0 = arith.muli %arg0, %c1_i32 : i32
    %1 = arith.addi %0, %arg1 : i32
    %c0_i32 = arith.constant 0 : i32
    %2 = arith.minsi %1, %c0_i32 : i32
    %c0_i32_0 = arith.constant 0 : i32
    %c0_i32_1 = arith.constant 0 : i32
    return %2, %c0_i32_0 : i32, i32
  }
  func.func @transform_2(%arg0: i32, %arg1: i32) -> (i32, i32, i32) {
    %c0_i32 = arith.constant 0 : i32
    %c0_i32_0 = arith.constant 0 : i32
    %c0_i32_1 = arith.constant 0 : i32
    return %arg0, %c0_i32, %c0_i32_0 : i32, i32, i32
  }
  func.func @transform_3(%arg0: i32, %arg1: i32) -> (i32, i32, i32) {
    %c0_i32 = arith.constant 0 : i32
    %c0_i32_0 = arith.constant 0 : i32
    %c0_i32_1 = arith.constant 0 : i32
    return %arg0, %c0_i32, %c0_i32_0 : i32, i32, i32
  }
  func.func @transform_4(%arg0: i32, %arg1: i32) -> (i32, i32, i32) {
    %c0_i32 = arith.constant 0 : i32
    %c0_i32_0 = arith.constant 0 : i32
    %c0_i32_1 = arith.constant 0 : i32
    return %arg0, %c0_i32, %c0_i32_0 : i32, i32, i32
  }
}

</mosaic_0001>

<llo_original>
// kernel: tpu_custom_call.1
$region0: #{tpu_custom_call.1}
  #allocation0 [shape = 'u32[]', space=smem, size = 0x4, offset = 0x4, fixed_abs, tag = 'smem constant byte address 0x4 - core index']
  #allocation1 [shape = 'u32[72,128]{1,0:T(1,128)}', space=vmem, size = 0x9000, scoped, tag = 'internal scratch']
  %s0 = inlined_call_operand.hbm [shape: f32[1,128], index: 0, kind: input, shape index: {}]
  %s1 = inlined_call_operand.hbm [shape: f32[1,128], index: 1, kind: input, shape index: {}]
  %s2 = inlined_call_operand.hbm [shape: f32[2,1,128], index: 2, kind: output, shape index: {0}]
  %s3 = inlined_call_operand.hbm [shape: f32[2,1,128], index: 3, kind: output, shape index: {1}]
  %s4 = inlined_call_operand.hbm [shape: f32[2,1,128], index: 4, kind: output, shape index: {2}]
  %5 = xla_tuple %s2, %s3, %s4
  %s6 = sld [smem:[#allocation0]]
  $region77: #{tpu_custom_call.1} parent=0
    _
  %s8 = ssub.s32 1, %s6
  %s9 = scalar_select 0, %s8, %s6
  $region1: #{tpu_custom_call.1} parent=0
    #allocation2 [shape = 'u8[1024]{0}', space=vmem, size = 0x400, scoped, tag = 'input window, operand 0']
    #allocation3 [shape = 's32[2]{0}', space=sflag, size = 0x8, scoped, tag = 'scoped memory for tpu_custom_call.1']
    #allocation4 [shape = 's32[2]{0}', space=sflag, size = 0x8, scoped, tag = 'scoped memory for tpu_custom_call.1']
    #allocation5 [shape = 'u8[1024]{0}', space=vmem, size = 0x400, scoped, tag = 'input window, operand 1']
    #allocation6 [shape = 's32[2]{0}', space=sflag, size = 0x8, scoped, tag = 'scoped memory for tpu_custom_call.1']
    #allocation7 [shape = 'u8[1024]{0}', space=vmem, size = 0x400, scoped, tag = 'output window, operand 0']
    #allocation8 [shape = 'u8[1024]{0}', space=vmem, size = 0x400, scoped, tag = 'output window, operand 1']
    #allocation9 [shape = 's32[2]{0}', space=sflag, size = 0x8, scoped, tag = 'scoped memory for tpu_custom_call.1']
    #allocation10 [shape = 'u8[1024]{0}', space=vmem, size = 0x400, scoped, tag = 'output window, operand 2']
    %10 = vsyncpa [#allocation3], 0
    %s11 = scalar_lea.sflag [#allocation3], 1
    %12 = vsyncpa %s11, 0
    %13 = vsyncpa [#allocation6], 0
    %s14 = scalar_lea.sflag [#allocation6], 1
    %15 = vsyncpa %s14, 0
    %16 = vsyncpa [#allocation4], 0
    %s17 = scalar_lea.sflag [#allocation4], 1
    %18 = vsyncpa %s17, 0
    %19 = vsyncpa [#allocation9], 0
    %s20 = scalar_lea.sflag [#allocation9], 1
    %21 = vsyncpa %s20, 0
    loop: start=0, step=1, limit=4
    $region2: #{tpu_custom_call.1} parent=1 // loop_pre_header
      _
    $region3: #{tpu_custom_call.1} parent=1 // loop_header
      %s23 = sphi 0, %s27
      %p24 = scmp.ge.s32.totalorder %s23, 4
      %s30 = sphi 0, %s42
      %s31 = sphi 0, %s38
      %s32 = sphi 0, %s30
      %s33 = sphi 0, %s31
      %s34 = sphi 0, %s32
      %s35 = sphi 0, %s33
      %s51 = sphi 0, %s53
      %s54 = sphi 0, %s51
      %s55 = sphi 0, %s54
      %s71 = sphi 0, %s55
      %s83 = sphi 0, %s85
      %s86 = sphi 0, %s83
      %s87 = sphi 0, %s86
      %s103 = sphi 0, %s87
      %s109 = sphi 0, %s111
      %s112 = sphi 0, %s109
      %s113 = sphi 0, %s112
      %s129 = sphi 0, %s113
      %s135 = sphi 0, %s137
      %s138 = sphi 0, %s135
      %s139 = sphi 0, %s138
      %s155 = sphi 0, %s139
      %s161 = sphi 0, %s163
      %s164 = sphi 0, %s161
      %s165 = sphi 0, %s164
      %s181 = sphi 0, %s165
    $region4: #{tpu_custom_call.1} parent=1 // loop_header_branch
      %26 = sbr.rel (%p24) target = $region8
    $region5: #{tpu_custom_call.1} parent=1 // loop_body
      %s28 = ssub.s32 %s23, 1
      %s29 = ssub.s32 %s23, 2
      %s36 = sadd.s32 1, %s31
      %p37 = scmp.ge.s32.totalorder %s36, 1
      %s38 = scalar_select %p37, 0, %s36
      %s39 = sadd.s32 1, %s30
      %s40 = scalar_select %p37, %s39, %s30
      %p41 = scmp.ge.s32.totalorder %s40, 2
      %s42 = scalar_select %p41, 0, %s40
      %s43 = sadd.s32 %s30, %s31
      %p44 = scmp.lt.s32.totalorder %s43, 0
      %s45 = scalar_select %p44, %s43, 0
      %s46 = sadd.s32 %s42, %s38
      %p47 = scmp.lt.s32.totalorder %s46, 0
      %s48 = scalar_select %p47, %s46, 0
      %s49 = ssub.s32 %s45, %s48
      %p50 = scmp.eq.s32.totalorder %s49, 0
      %s52 = sadd.s32 %s51, 1
      %s53 = scalar_select %p50, %s51, %s52
      %p56 = pneg %p50
      %p57 = scmp.eq.s32.totalorder %s23, 1
      %p58 = por %p56, %p57
      %p59 = scmp.ne.s32.totalorder %s51, %s54
      %p60 = scmp.eq.s32.totalorder %s23, 0
      %p61 = por %p59, %p60
      %p62 = scmp.ne.s32.totalorder %s51, %s54
      %p63 = scmp.eq.s32.totalorder %s28, 1
      %p64 = por %p62, %p63
      %p65 = scmp.ne.s32.totalorder %s54, %s55
      %p66 = scmp.eq.s32.totalorder %s28, 0
      %p67 = por %p65, %p66
      %p68 = scmp.ne.s32.totalorder %s54, %s55
      %p69 = scmp.eq.s32.totalorder %s29, 1
      %p70 = por %p68, %p69
      %p72 = scmp.ne.s32.totalorder %s55, %s71
      %p73 = scmp.eq.s32.totalorder %s29, 0
      %p74 = por %p72, %p73
      %s75 = sadd.s32 %s30, %s31
      %p76 = scmp.lt.s32.totalorder %s75, 0
      %s77 = scalar_select %p76, %s75, 0
      %s78 = sadd.s32 %s42, %s38
      %p79 = scmp.lt.s32.totalorder %s78, 0
      %s80 = scalar_select %p79, %s78, 0
      %s81 = ssub.s32 %s77, %s80
      %p82 = scmp.eq.s32.totalorder %s81, 0
      %s84 = sadd.s32 %s83, 1
      %s85 = scalar_select %p82, %s83, %s84
      %p88 = pneg %p82
      %p89 = scmp.eq.s32.totalorder %s23, 1
      %p90 = por %p88, %p89
      %p91 = scmp.ne.s32.totalorder %s83, %s86
      %p92 = scmp.eq.s32.totalorder %s23, 0
      %p93 = por %p91, %p92
      %p94 = scmp.ne.s32.totalorder %s83, %s86
      %p95 = scmp.eq.s32.totalorder %s28, 1
      %p96 = por %p94, %p95
      %p97 = scmp.ne.s32.totalorder %s86, %s87
      %p98 = scmp.eq.s32.totalorder %s28, 0
      %p99 = por %p97, %p98
      %p100 = scmp.ne.s32.totalorder %s86, %s87
      %p101 = scmp.eq.s32.totalorder %s29, 1
      %p102 = por %p100, %p101
      %p104 = scmp.ne.s32.totalorder %s87, %s103
      %p105 = scmp.eq.s32.totalorder %s29, 0
      %p106 = por %p104, %p105
      %s107 = ssub.s32 %s30, %s42
      %p108 = scmp.eq.s32.totalorder %s107, 0
      %s110 = sadd.s32 %s109, 1
      %s111 = scalar_select %p108, %s109, %s110
      %p114 = pneg %p108
      %p115 = scmp.eq.s32.totalorder %s23, 1
      %p116 = por %p114, %p115
      %p117 = scmp.ne.s32.totalorder %s109, %s112
      %p118 = scmp.eq.s32.totalorder %s23, 0
      %p119 = por %p117, %p118
      %p120 = scmp.ne.s32.totalorder %s109, %s112
      %p121 = scmp.eq.s32.totalorder %s28, 1
      %p122 = por %p120, %p121
      %p123 = scmp.ne.s32.totalorder %s112, %s113
      %p124 = scmp.eq.s32.totalorder %s28, 0
      %p125 = por %p123, %p124
      %p126 = scmp.ne.s32.totalorder %s112, %s113
      %p127 = scmp.eq.s32.totalorder %s29, 1
      %p128 = por %p126, %p127
      %p130 = scmp.ne.s32.totalorder %s113, %s129
      %p131 = scmp.eq.s32.totalorder %s29, 0
      %p132 = por %p130, %p131
      %s133 = ssub.s32 %s30, %s42
      %p134 = scmp.eq.s32.totalorder %s133, 0
      %s136 = sadd.s32 %s135, 1
      %s137 = scalar_select %p134, %s135, %s136
      %p140 = pneg %p134
      %p141 = scmp.eq.s32.totalorder %s23, 1
      %p142 = por %p140, %p141
      %p143 = scmp.ne.s32.totalorder %s135, %s138
      %p144 = scmp.eq.s32.totalorder %s23, 0
      %p145 = por %p143, %p144
      %p146 = scmp.ne.s32.totalorder %s135, %s138
      %p147 = scmp.eq.s32.totalorder %s28, 1
      %p148 = por %p146, %p147
      %p149 = scmp.ne.s32.totalorder %s138, %s139
      %p150 = scmp.eq.s32.totalorder %s28, 0
      %p151 = por %p149, %p150
      %p152 = scmp.ne.s32.totalorder %s138, %s139
      %p153 = scmp.eq.s32.totalorder %s29, 1
      %p154 = por %p152, %p153
      %p156 = scmp.ne.s32.totalorder %s139, %s155
      %p157 = scmp.eq.s32.totalorder %s29, 0
      %p158 = por %p156, %p157
      %s159 = ssub.s32 %s30, %s42
      %p160 = scmp.eq.s32.totalorder %s159, 0
      %s162 = sadd.s32 %s161, 1
      %s163 = scalar_select %p160, %s161, %s162
      %p166 = pneg %p160
      %p167 = scmp.eq.s32.totalorder %s23, 1
      %p168 = por %p166, %p167
      %p169 = scmp.ne.s32.totalorder %s161, %s164
      %p170 = scmp.eq.s32.totalorder %s23, 0
      %p171 = por %p169, %p170
      %p172 = scmp.ne.s32.totalorder %s161, %s164
      %p173 = scmp.eq.s32.totalorder %s28, 1
      %p174 = por %p172, %p173
      %p175 = scmp.ne.s32.totalorder %s164, %s165
      %p176 = scmp.eq.s32.totalorder %s28, 0
      %p177 = por %p175, %p176
      %p178 = scmp.ne.s32.totalorder %s164, %s165
      %p179 = scmp.eq.s32.totalorder %s29, 1
      %p180 = por %p178, %p179
      %p182 = scmp.ne.s32.totalorder %s165, %s181
      %p183 = scmp.eq.s32.totalorder %s29, 0
      %p184 = por %p182, %p183
      %p185 = scmp.le.s32.totalorder 1, %s23
      %p186 = scmp.lt.s32.totalorder %s23, 3
      %p187 = pnand %p185, %p186
      %p188 = pneg %p187
      // Predicated region
      $region9: #{tpu_custom_call.1} parent=5 // pred_check
        _
      $region10: #{tpu_custom_call.1} parent=5 // pred_check_branch
        %190 = sbr.rel (%p187) target = $region12
      $region11: #{tpu_custom_call.1} parent=5 // pred_region
        %s191 = ssub.s32 %s23, 1
      $region12: #{tpu_custom_call.1} parent=5 // pred_fallthru
        _
      %p192 = scmp.lt.s32.totalorder %s23, 2
      // Predicated region
      $region13: #{tpu_custom_call.1} parent=5 // pred_check
        %p193 = pneg %p192
      $region14: #{tpu_custom_call.1} parent=5 // pred_check_branch
        %195 = sbr.rel (%p193) target = $region16
      $region15: #{tpu_custom_call.1} parent=5 // pred_region
        // Predicated region
        $region17: #{tpu_custom_call.1} parent=15 // pred_check
          %p196 = pneg %p61
        $region18: #{tpu_custom_call.1} parent=15 // pred_check_branch
          %198 = sbr.rel (%p196) target = $region20
        $region19: #{tpu_custom_call.1} parent=15 // pred_region
          %s199 = sand.u32 %s51, 1
          %s200 = scalar_lea.sflag [#allocation3], %s199
          %s201 = sand.u32 %s51, 1
          %s202 = scalar_lea.vmem [#allocation2], %s201
          %s203 = sadd.s32 %s30, %s31
          %p204 = scmp.lt.s32.totalorder %s203, 0
          %s205 = scalar_select %p204, %s203, 0
          %207 = vsyncadd %s200, 0
          %s208 = scalar_lea.hbm %s0, %s205
          %s210 = sshll.u32 %s208, 4
          %s211 = int_to_ptr.hbm [resolvable:$true] %s210
          %s212 = sshll.u32 %s202, 4
          %s213 = int_to_ptr.vmem [resolvable:$true] %s212
          %215 = dma.hbm_to_vmem [thread:$0]  %s211, 16, %s213, %s200
        $region20: #{tpu_custom_call.1} parent=15 // pred_fallthru
          _
        // Predicated region
        $region21: #{tpu_custom_call.1} parent=15 // pred_check
          %p216 = pneg %p93
        $region22: #{tpu_custom_call.1} parent=15 // pred_check_branch
          %218 = sbr.rel (%p216) target = $region24
        $region23: #{tpu_custom_call.1} parent=15 // pred_region
          %s219 = sand.u32 %s83, 1
          %s220 = scalar_lea.sflag [#allocation6], %s219
          %s221 = sand.u32 %s83, 1
          %s222 = scalar_lea.vmem [#allocation5], %s221
          %s223 = sadd.s32 %s30, %s31
          %p224 = scmp.lt.s32.totalorder %s223, 0
          %s225 = scalar_select %p224, %s223, 0
          %227 = vsyncadd %s220, 0
          %s228 = scalar_lea.hbm %s1, %s225
          %s230 = sshll.u32 %s228, 4
          %s231 = int_to_ptr.hbm [resolvable:$true] %s230
          %s232 = sshll.u32 %s222, 4
          %s233 = int_to_ptr.vmem [resolvable:$true] %s232
          %235 = dma.hbm_to_vmem [thread:$0]  %s231, 16, %s233, %s220
        $region24: #{tpu_custom_call.1} parent=15 // pred_fallthru
          _
      $region16: #{tpu_custom_call.1} parent=5 // pred_fallthru
        _
      %p236 = scmp.le.s32.totalorder 1, %s23
      %p237 = scmp.lt.s32.totalorder %s23, 3
      %p238 = pnand %p236, %p237
      %p239 = pneg %p238
      // Predicated region
      $region25: #{tpu_custom_call.1} parent=5 // pred_check
        _
      $region26: #{tpu_custom_call.1} parent=5 // pred_check_branch
        %241 = sbr.rel (%p238) target = $region28
      $region27: #{tpu_custom_call.1} parent=5 // pred_region
        %s242 = ssub.s32 %s23, 1
        %s243 = sand.u32 %s54, 1
        %s244 = scalar_lea.sflag [#allocation3], %s243
        %s245 = sand.u32 %s54, 1
        %s246 = scalar_lea.vmem [#allocation2], %s245
        // Predicated region
        $region29: #{tpu_custom_call.1} parent=27 // pred_check
          %p247 = pneg %p67
        $region30: #{tpu_custom_call.1} parent=27 // pred_check_branch
          %249 = sbr.rel (%p247) target = $region32
        $region31: #{tpu_custom_call.1} parent=27 // pred_region
          %251 = dma.done %s244, 16
        $region32: #{tpu_custom_call.1} parent=27 // pred_fallthru
          _
        %s252 = sand.u32 %s86, 1
        %s253 = scalar_lea.sflag [#allocation6], %s252
        %s254 = sand.u32 %s86, 1
        %s255 = scalar_lea.vmem [#allocation5], %s254
        // Predicated region
        $region33: #{tpu_custom_call.1} parent=27 // pred_check
          %p256 = pneg %p99
        $region34: #{tpu_custom_call.1} parent=27 // pred_check_branch
          %258 = sbr.rel (%p256) target = $region36
        $region35: #{tpu_custom_call.1} parent=27 // pred_region
          %260 = dma.done %s253, 16
        $region36: #{tpu_custom_call.1} parent=27 // pred_fallthru
          _
        %s261 = sand.u32 %s54, 1
        %s262 = scalar_lea.sflag [#allocation3], %s261
        %s263 = sand.u32 %s54, 1
        %s264 = scalar_lea.vmem [#allocation2], %s263
        %p265 = pneg %p67
        %p266 = pneg %p64
        %s267 = sand.u32 %s86, 1
        %s268 = scalar_lea.sflag [#allocation6], %s267
        %s269 = sand.u32 %s86, 1
        %s270 = scalar_lea.vmem [#allocation5], %s269
        %p271 = pneg %p99
        %p272 = pneg %p96
        %p273 = pneg %p125
        %p274 = pneg %p122
        %s275 = sand.u32 %s112, 1
        %s276 = scalar_lea.sflag [#allocation4], %s275
        %s277 = sand.u32 %s112, 1
        %s278 = scalar_lea.vmem [#allocation7], %s277
        %p279 = pneg %p151
        %p280 = pneg %p148
        %s281 = sand.u32 %s28, 1
        %s282 = scalar_lea.sflag [#allocation9], %s281
        %s283 = sand.u32 %s138, 1
        %s284 = scalar_lea.vmem [#allocation8], %s283
        %p285 = pneg %p177
        %p286 = pneg %p174
        %s287 = sand.u32 %s28, 1
        %s288 = scalar_lea.sflag [#allocation9], %s287
        %s289 = sand.u32 %s164, 1
        %s290 = scalar_lea.vmem [#allocation10], %s289
        %s291 = sadd.s32 %s32, %s33
        %p292 = scmp.lt.s32.totalorder %s291, 0
        %s293 = scalar_select %p292, %s291, 0
        %s294 = sadd.s32 %s32, %s33
        %p295 = scmp.lt.s32.totalorder %s294, 0
        %s296 = scalar_select %p295, %s294, 0
        %s297 = sadd.s32 %s32, %s33
        %p298 = scmp.eq.s32.totalorder %s33, 0
        // Predicated region
        $region37: #{tpu_custom_call.1} parent=27 // pred_check
          %p299 = pneg %p298
        $region38: #{tpu_custom_call.1} parent=27 // pred_check_branch
          %301 = sbr.rel (%p299) target = $region40
        $region39: #{tpu_custom_call.1} parent=27 // pred_region
          %302 = vst [vmem:[%s278] sm:$0x1] 0.0
          %303 = vst [vmem:[%s284] sm:$0x1] 0.0
          %304 = vst [vmem:[%s290] sm:$0x1] 0.0
        $region40: #{tpu_custom_call.1} parent=27 // pred_fallthru
          _
        %p305 = scmp.ge.s32.totalorder %s297, 1
        // Predicated region
        $region41: #{tpu_custom_call.1} parent=27 // pred_check
          %p306 = pneg %p305
        $region42: #{tpu_custom_call.1} parent=27 // pred_check_branch
          %308 = sbr.rel (%p306) target = $region44
        $region43: #{tpu_custom_call.1} parent=27 // pred_region
          %v309 = vld [vmem:[%s246] sm:$0x1]
          %v310 = vld [vmem:[%s255] sm:$0x1]
          %v311 = vlaneseq
          %v312 = vshrl.u32 %v311, 7
          %v313 = vstv %s297
          %v314 = vadd.s32 %v313, %v312
          %vm315 = vcmp.lt.s32.totalorder %v314, 1
          %v316 = vsel %vm315, %v310, 0.0
          %vm317 = vcmp.ge.f32.partialorder %v309, 0.5
          %v318 = vsel %vm317, 1, 0
          %v319 = vcvt.s32.f32 %v318
          %v320 = vld [vmem:[%s278] sm:$0x1]
          %v321 = vmul.f32 %v316, %v319
          %v322 = vadd.f32 %v321, 0.0
          %v323 = vadd.f32 %v320, %v322
          %324 = vst [vmem:[%s278] sm:$0x1] %v323
          %v325 = vld [vmem:[%s284] sm:$0x1]
          %v326 = vadd.f32 %v316, 0.0
          %v327 = vadd.f32 %v325, %v326
          %328 = vst [vmem:[%s284] sm:$0x1] %v327
        $region44: #{tpu_custom_call.1} parent=27 // pred_fallthru
          _
        %p329 = scmp.lt.s32.totalorder %s297, 1
        // Predicated region
        $region45: #{tpu_custom_call.1} parent=27 // pred_check
          %p330 = pneg %p329
        $region46: #{tpu_custom_call.1} parent=27 // pred_check_branch
          %332 = sbr.rel (%p330) target = $region48
        $region47: #{tpu_custom_call.1} parent=27 // pred_region
          %v333 = vld [vmem:[%s246] sm:$0x1]
          %v334 = vld [vmem:[%s255] sm:$0x1]
          %vm335 = vcmp.ge.f32.partialorder %v333, 0.5
          %v336 = vsel %vm335, 1, 0
          %v337 = vcvt.s32.f32 %v336
          %v338 = vld [vmem:[%s278] sm:$0x1]
          %v339 = vmul.f32 %v334, %v337
          %v340 = vadd.f32 %v339, 0.0
          %v341 = vadd.f32 %v338, %v340
          %342 = vst [vmem:[%s278] sm:$0x1] %v341
          %v343 = vld [vmem:[%s284] sm:$0x1]
          %v344 = vadd.f32 %v334, 0.0
          %v345 = vadd.f32 %v343, %v344
          %346 = vst [vmem:[%s284] sm:$0x1] %v345
        $region48: #{tpu_custom_call.1} parent=27 // pred_fallthru
          _
        %s347 = sand.u32 %s112, 1
        %s348 = scalar_lea.sflag [#allocation4], %s347
        %s349 = sand.u32 %s112, 1
        %s350 = scalar_lea.vmem [#allocation7], %s349
        %s351 = sand.u32 %s28, 1
        %s352 = scalar_lea.sflag [#allocation9], %s351
        %s353 = sand.u32 %s138, 1
        %s354 = scalar_lea.vmem [#allocation8], %s353
        %s355 = sand.u32 %s28, 1
        %s356 = scalar_lea.sflag [#allocation9], %s355
        %s357 = sand.u32 %s164, 1
        %s358 = scalar_lea.vmem [#allocation10], %s357
        // Predicated region
        $region49: #{tpu_custom_call.1} parent=27 // pred_check
          %p359 = pneg %p122
        $region50: #{tpu_custom_call.1} parent=27 // pred_check_branch
          %361 = sbr.rel (%p359) target = $region52
        $region51: #{tpu_custom_call.1} parent=27 // pred_region
          %363 = vsyncadd %s348, 0
          %s364 = scalar_lea.hbm %s2, %s32
          %s366 = sshll.u32 %s350, 4
          %s367 = int_to_ptr.vmem [resolvable:$true] %s366
          %s368 = sshll.u32 %s364, 4
          %s369 = int_to_ptr.hbm [resolvable:$true] %s368
          %371 = dma.vmem_to_hbm [thread:$0]  %s367, 16, %s369, %s348
        $region52: #{tpu_custom_call.1} parent=27 // pred_fallthru
          _
        // Predicated region
        $region53: #{tpu_custom_call.1} parent=27 // pred_check
          %p372 = pneg %p148
        $region54: #{tpu_custom_call.1} parent=27 // pred_check_branch
          %374 = sbr.rel (%p372) target = $region56
        $region55: #{tpu_custom_call.1} parent=27 // pred_region
          %376 = vsyncadd %s352, 0
          %s377 = scalar_lea.hbm %s3, %s32
          %s379 = sshll.u32 %s354, 4
          %s380 = int_to_ptr.vmem [resolvable:$true] %s379
          %s381 = sshll.u32 %s377, 4
          %s382 = int_to_ptr.hbm [resolvable:$true] %s381
          %384 = dma.vmem_to_hbm [thread:$0]  %s380, 16, %s382, %s352
        $region56: #{tpu_custom_call.1} parent=27 // pred_fallthru
          _
        // Predicated region
        $region57: #{tpu_custom_call.1} parent=27 // pred_check
          %p385 = pneg %p174
        $region58: #{tpu_custom_call.1} parent=27 // pred_check_branch
          %387 = sbr.rel (%p385) target = $region60
        $region59: #{tpu_custom_call.1} parent=27 // pred_region
          %389 = vsyncadd %s356, 0
          %s390 = scalar_lea.hbm %s4, %s32
          %s392 = sshll.u32 %s358, 4
          %s393 = int_to_ptr.vmem [resolvable:$true] %s392
          %s394 = sshll.u32 %s390, 4
          %s395 = int_to_ptr.hbm [resolvable:$true] %s394
          %397 = dma.vmem_to_hbm [thread:$0]  %s393, 16, %s395, %s356
        $region60: #{tpu_custom_call.1} parent=27 // pred_fallthru
          _
      $region28: #{tpu_custom_call.1} parent=5 // pred_fallthru
        _
      %p398 = scmp.le.s32.totalorder 2, %s23
      // Predicated region
      $region61: #{tpu_custom_call.1} parent=5 // pred_check
        %p399 = pneg %p398
      $region62: #{tpu_custom_call.1} parent=5 // pred_check_branch
        %401 = sbr.rel (%p399) target = $region64
      $region63: #{tpu_custom_call.1} parent=5 // pred_region
        %s402 = ssub.s32 %s23, 2
        // Predicated region
        $region65: #{tpu_custom_call.1} parent=63 // pred_check
          %p403 = pneg %p128
        $region66: #{tpu_custom_call.1} parent=63 // pred_check_branch
          %405 = sbr.rel (%p403) target = $region68
        $region67: #{tpu_custom_call.1} parent=63 // pred_region
          %s406 = sand.u32 %s113, 1
          %s407 = scalar_lea.sflag [#allocation4], %s406
          %s408 = sand.u32 %s113, 1
          %s409 = scalar_lea.vmem [#allocation7], %s408
          %411 = dma.done %s407, 16
        $region68: #{tpu_custom_call.1} parent=63 // pred_fallthru
          _
        // Predicated region
        $region69: #{tpu_custom_call.1} parent=63 // pred_check
          %p412 = pneg %p154
        $region70: #{tpu_custom_call.1} parent=63 // pred_check_branch
          %414 = sbr.rel (%p412) target = $region72
        $region71: #{tpu_custom_call.1} parent=63 // pred_region
          %s415 = sand.u32 %s29, 1
          %s416 = scalar_lea.sflag [#allocation9], %s415
          %s417 = sand.u32 %s139, 1
          %s418 = scalar_lea.vmem [#allocation8], %s417
          %420 = dma.done %s416, 16
        $region72: #{tpu_custom_call.1} parent=63 // pred_fallthru
          _
        // Predicated region
        $region73: #{tpu_custom_call.1} parent=63 // pred_check
          %p421 = pneg %p180
        $region74: #{tpu_custom_call.1} parent=63 // pred_check_branch
          %423 = sbr.rel (%p421) target = $region76
        $region75: #{tpu_custom_call.1} parent=63 // pred_region
          %s424 = sand.u32 %s29, 1
          %s425 = scalar_lea.sflag [#allocation9], %s424
          %s426 = sand.u32 %s165, 1
          %s427 = scalar_lea.vmem [#allocation10], %s426
          %429 = dma.done %s425, 16
        $region76: #{tpu_custom_call.1} parent=63 // pred_fallthru
          _
      $region64: #{tpu_custom_call.1} parent=5 // pred_fallthru
        _
    $region6: #{tpu_custom_call.1} parent=1 // loop_footer
      %s27 = sadd.s32 1, %s23
    $region7: #{tpu_custom_call.1} parent=1 // loop_footer_branch
      %22 = sbr.rel target = $region3
    $region8: #{tpu_custom_call.1} parent=1 // loop_exit
      _
    %430 = vsyncpa [#allocation3], 1
    %s431 = scalar_lea.sflag [#allocation3], 1
    %432 = vsyncpa %s431, 1
    %433 = vsyncpa [#allocation6], 1
    %s434 = scalar_lea.sflag [#allocation6], 1
    %435 = vsyncpa %s434, 1
    %436 = vsyncpa [#allocation4], 1
    %s437 = scalar_lea.sflag [#allocation4], 1
    %438 = vsyncpa %s437, 1
    %439 = vsyncpa [#allocation9], 1
    %s440 = scalar_lea.sflag [#allocation9], 1
    %441 = vsyncpa %s440, 1

</llo_original>
